<compile_context>
chip_gen: v5e
topology: v5e:2x2
jax: 0.10.0
libtpu: 0.0.40
codegen_flags: <defaults>
</compile_context>

<pallas_src>
import jax
import jax.numpy as jnp
from jax.experimental import pallas as pl
from jax.experimental.pallas import tpu as pltpu


# --------------------------------------------------------------------------
# lane-shift helpers (XLU roll + direction probe)
# --------------------------------------------------------------------------
_SHIFT_FNS = None


def _shift_fns():
    """Return (shift_prev, shift_next) helpers built on the native XLU rotate.

    The rotate direction convention is pinned down once with a tiny probe
    kernel so the conv-tap assignment is correct on either convention.
    """
    global _SHIFT_FNS
    if _SHIFT_FNS is not None:
        return _SHIFT_FNS

    def probe_kernel(x_ref, o_ref):
        o_ref[...] = pltpu.roll(x_ref[...], 1, axis=1)

    xp = jnp.arange(128, dtype=jnp.float32).reshape(1, 128)
    yp = pl.pallas_call(
        probe_kernel,
        out_shape=jax.ShapeDtypeStruct((1, 128), jnp.float32),
    )(xp)
    # jnp.roll-like (right rotate): yp = [127, 0, 1, ...] -> yp[0, 1] == 0.
    right_rotate = bool(jax.device_get(yp)[0, 1] == 0.0)

    def shift_prev(v):          # out[..., t] = in[..., t - 1]   (circular)
        m = v.shape[-1]
        return pltpu.roll(v, 1 if right_rotate else m - 1, axis=v.ndim - 1)

    def shift_next(v):          # out[..., t] = in[..., t + 1]   (circular)
        m = v.shape[-1]
        return pltpu.roll(v, m - 1 if right_rotate else 1, axis=v.ndim - 1)

    _SHIFT_FNS = (shift_prev, shift_next)
    return _SHIFT_FNS


# --------------------------------------------------------------------------
# fused kernel
# --------------------------------------------------------------------------
def _build_kernel(shift_prev, shift_next):
    def kernel(x_ref,
               gmat_ref, mp1_ref, mn1_ref, mp2_ref, mn2_ref,
               w1_ref, b1_ref, w2_ref, b2_ref, w3_ref, b3_ref, w4_ref, b4_ref,
               out_ref):
        f32 = jnp.float32
        x = x_ref[0].astype(f32)                         # (1, B*L)
        mp1, mn1 = mp1_ref[...], mn1_ref[...]            # (1, B*L)
        mp2, mn2 = mp2_ref[...], mn2_ref[...]            # (1, B*L/2)

        # ---- layer 1 (Cin=1): 3-tap broadcast FMA on the VPU (MXU would be
        #      <1% utilized with K=1), BN scale pre-folded into w1. ----
        x_prev = shift_prev(x) * mp1                     # zero at sample starts
        x_next = shift_next(x) * mn1                     # zero at sample ends
        w1 = w1_ref[...]                                 # (16, 3)
        h = (w1[:, 0:1] * x_prev + w1[:, 1:2] * x + w1[:, 2:3] * x_next
             + b1_ref[...])
        h = jnp.maximum(h, 0.0)                          # (16, B*L)

        # ---- MaxPool1d(2, 2): pairwise max via XLU roll, then ONE even-lane
        #      gather matmul (pairs never straddle a sample boundary). ----
        hp = jnp.maximum(h, shift_next(h))
        h = jnp.dot(hp.astype(jnp.bfloat16), gmat_ref[...],
                    preferred_element_type=f32)          # (16, B*L/2)

        # ---- layers 2..4: single fused 3-tap bf16 matmul per layer,
        #      BN scale folded into W, f32 bias + ReLU epilogue. ----
        def conv_bn_relu(v, w_ref, b_ref):
            v_prev = shift_prev(v) * mp2
            v_next = shift_next(v) * mn2
            stacked = jnp.concatenate([v_prev, v, v_next],
                                      axis=0).astype(jnp.bfloat16)
            y = jnp.dot(w_ref[...], stacked, preferred_element_type=f32)
            return jnp.maximum(y + b_ref[...], 0.0)

        h = conv_bn_relu(h, w2_ref, b2_ref)              # (32,  B*L/2)
        h = conv_bn_relu(h, w3_ref, b3_ref)              # (64,  B*L/2)
        h = conv_bn_relu(h, w4_ref, b4_ref)              # (128, B*L/2)

        out_ref[0] = h.astype(out_ref.dtype)

    return kernel


# --------------------------------------------------------------------------
# wrapper
# --------------------------------------------------------------------------
def shared_feature_extractor(x, params, samples_per_step=4):
    """x: (N, 1, L) -> (N, 128, L // 2).  samples_per_step >= 4 keeps the
    post-pool lane width >= 256 (v6e/v7x MXU); 2 already fills a v5e tile."""
    N, c_in, L = x.shape
    assert c_in == 1 and L % 2 == 0
    L2 = L // 2
    out_c = params["w4"].shape[0]

    B = max(1, min(samples_per_step, N))
    G = pl.cdiv(N, B)
    n_pad = G * B - N
    if n_pad:
        x = jnp.concatenate([x, jnp.zeros((n_pad, c_in, L), x.dtype)], axis=0)
    BL, BL2 = B * L, B * L2
    xl = x.reshape(G, 1, BL)            # B samples concatenated along lanes

    # Host-built constants; constant index_map => DMA'd once, VMEM-resident.
    row = jnp.arange(BL)[:, None]
    col = jnp.arange(BL2)[None, :]
    gmat = (row == 2 * col).astype(jnp.bfloat16)              # even-lane gather
    p1 = jnp.arange(BL)
    mp1 = (p1 % L != 0).astype(jnp.float32)[None, :]          # prev-tap mask
    mn1 = (p1 % L != L - 1).astype(jnp.float32)[None, :]      # next-tap mask
    p2 = jnp.arange(BL2)
    mp2 = (p2 % L2 != 0).astype(jnp.float32)[None, :]
    mn2 = (p2 % L2 != L2 - 1).astype(jnp.float32)[None, :]

    # Weights (BN scale already folded in init_params).  Layer 1 stays f32 on
    # the VPU; layers 2-4 are stacked [k0 | k1 | k2] along Cin and cast to bf16
    # for the MXU.
    w1 = params["w1"][:, 0, :].astype(jnp.float32)            # (16, 3)
    b1 = params["b1"].astype(jnp.float32)

    def stack_w(w):                                           # (Co,Ci,3)->(Co,3Ci)
        co, ci, _ = w.shape
        return jnp.transpose(w, (0, 2, 1)).reshape(co, 3 * ci).astype(jnp.bfloat16)

    w2, w3, w4 = (stack_w(params[k]) for k in ("w2", "w3", "w4"))
    b2, b3, b4 = (params[k].astype(jnp.float32) for k in ("b2", "b3", "b4"))

    consts = [gmat, mp1, mn1, mp2, mn2, w1, b1, w2, b2, w3, b3, w4, b4]

    def const_spec(a):
        return pl.BlockSpec(a.shape, lambda g, _nd=a.ndim: (0,) * _nd)

    shift_prev, shift_next = _shift_fns()
    kernel = _build_kernel(shift_prev, shift_next)

    out = pl.pallas_call(
        kernel,
        out_shape=jax.ShapeDtypeStruct((G, out_c, BL2), x.dtype),
        grid_spec=pltpu.PrefetchScalarGridSpec(
            num_scalar_prefetch=0,
            grid=(G,),
            in_specs=[pl.BlockSpec((1, 1, BL), lambda g: (g, 0, 0))]
                    + [const_spec(a) for a in consts],
            out_specs=pl.BlockSpec((1, out_c, BL2), lambda g: (g, 0, 0)),
        ),
        compiler_params=pltpu.CompilerParams(
            dimension_semantics=("parallel",)),
    )(xl, *consts)

    # (G, out_c, B*L2) -> (N, out_c, L2): host-side layout plumbing only.
    out = out.reshape(G, out_c, B, L2).transpose(0, 2, 1, 3)
    return out.reshape(G * B, out_c, L2)[:N]


# --------------------------------------------------------------------------
# deterministic parameter init (synthetic; mirrors Conv1d / BatchNorm1d shapes)
# BN (eval mode) is folded: w' = w * scale, b' = (conv_b - mean) * scale + beta
# --------------------------------------------------------------------------
def init_params(key, in_channel=1, out_channel=128, eps=1e-5):
    layer_channels = [(in_channel, 16), (16, 32), (32, 64), (64, out_channel)]
    params = {}
    for i, (cin, cout) in enumerate(layer_channels, start=1):
        key, kw, kb, kg, kbe, km, kv = jax.random.split(key, 7)
        bound = 1.0 / jnp.sqrt(jnp.float32(cin * 3))
        w = jax.random.uniform(kw, (cout, cin, 3), jnp.float32, -bound, bound)
        conv_b = jax.random.uniform(kb, (cout,), jnp.float32, -bound, bound)
        gamma = jax.random.uniform(kg, (cout,), jnp.float32, 0.5, 1.5)
        beta = jax.random.uniform(kbe, (cout,), jnp.float32, -0.1, 0.1)
        run_mean = 0.1 * jax.random.normal(km, (cout,), jnp.float32)
        run_var = jax.random.uniform(kv, (cout,), jnp.float32, 0.5, 1.5)

        scale = gamma / jnp.sqrt(run_var + eps)
        params[f"w{i}"] = w * scale[:, None, None]                    # (Co,Ci,3)
        params[f"b{i}"] = ((conv_b - run_mean) * scale + beta)[:, None]  # (Co,1)
    return params


# --------------------------------------------------------------------------
# pure-JAX reference (same folded params).  mxu_dtype=jnp.bfloat16 mirrors the
# kernel's MXU-input rounding so the comparison tolerance can stay tight.
# --------------------------------------------------------------------------
def reference(x, params, mxu_dtype=None):
    cast = (lambda a: a) if mxu_dtype is None else (
        lambda a: a.astype(mxu_dtype).astype(jnp.float32))

    def conv3(h, w):                        # h: (N,Ci,M), w: (Co,Ci,3)
        M = h.shape[-1]
        hp = jnp.pad(h, ((0, 0), (0, 0), (1, 1)))
        return sum(jnp.einsum("oc,ncl->nol", w[:, :, k], hp[:, :, k:k + M])
                   for k in range(3))

    h = jnp.maximum(conv3(x, params["w1"]) + params["b1"], 0.0)
    n, c, M = h.shape
    h = jnp.max(h.reshape(n, c, M // 2, 2), axis=-1)
    for i in (2, 3, 4):
        h = jnp.maximum(conv3(cast(h), cast(params[f"w{i}"]))
                        + params[f"b{i}"], 0.0)
    return h


if __name__ == "__main__":
    key = jax.random.PRNGKey(0)
    k_x, k_p = jax.random.split(key)

    N, C_IN, L = 8, 1, 128          # input (N, 1, L); output (N, 128, L // 2)
    x = jax.random.normal(k_x, (N, C_IN, L), jnp.float32)
    params = init_params(k_p, in_channel=C_IN, out_channel=128)

    out = shared_feature_extractor(x, params, samples_per_step=4)
    out = jax.block_until_ready(out)
    assert out.shape == (N, 128, L // 2), out.shape

    # Tight check against the bf16-MXU-mirrored reference.
    ref_bf16 = reference(x, params, mxu_dtype=jnp.bfloat16)
    err = float(jnp.max(jnp.abs(out - ref_bf16)))
    assert jnp.allclose(out, ref_bf16, atol=1e-2, rtol=1e-2), err

    # Loose sanity check against the exact-f32 module semantics (only deviation
    # is the documented bf16 MXU-operand rounding in layers 2-4 + pool gather).
    ref_f32 = reference(x, params)
    err32 = float(jnp.max(jnp.abs(out - ref_f32)))
    assert jnp.allclose(out, ref_f32, atol=2e-1, rtol=2e-1), err32

    print("KERNEL_OK")
</pallas_src>

<mosaic_0001>
module attributes {stable_mosaic.version = 11 : i64} {
  func.func @probe_kernel(%arg0: memref<1x128xf32, #tpu.memory_space<vmem>>, %arg1: memref<1x128xf32, #tpu.memory_space<vmem>>) attributes {dimension_semantics = [], scalar_prefetch = 0 : i64, scratch_operands = 0 : i64, tpu.core_type = #tpu.core_type<tc>} {
    %c0 = arith.constant 0 : index
    %c0_0 = arith.constant 0 : index
    %0 = vector.load %arg0[%c0, %c0_0] : memref<1x128xf32, #tpu.memory_space<vmem>>, vector<1x128xf32>
    %c1_i32 = arith.constant 1 : i32
    %1 = tpu.dynamic_rotate %0 by %c1_i32 dim 1 : vector<1x128xf32>, i32 -> vector<1x128xf32>
    %c0_1 = arith.constant 0 : index
    %c0_2 = arith.constant 0 : index
    %2 = vector.load %arg1[%c0_1, %c0_2] : memref<1x128xf32, #tpu.memory_space<vmem>>, vector<1x128xf32>
    tpu.vector_store %arg1[%c0_1, %c0_2], %1 {strides = array<i32>} : memref<1x128xf32, #tpu.memory_space<vmem>>, vector<1x128xf32>,
    return
  }
}

</mosaic_0001>

<llo_original>
// kernel: tpu_custom_call.1
$region0: #{tpu_custom_call.1}
  #allocation0 [shape = 'u32[]', space=smem, size = 0x4, offset = 0x4, fixed_abs, tag = 'smem constant byte address 0x4 - core index']
  #allocation1 [shape = 'u32[72,128]{1,0:T(1,128)}', space=vmem, size = 0x9000, scoped, tag = 'internal scratch']
  %s0 = inlined_call_operand.hbm [shape: f32[1,128], index: 0, kind: input, shape index: {}]
  %s1 = inlined_call_operand.hbm [shape: f32[1,128], index: 1, kind: output, shape index: {}]
  %s2 = sld [smem:[#allocation0]]
  $region18: #{tpu_custom_call.1} parent=0
    _
  %s4 = ssub.s32 1, %s2
  %s5 = scalar_select 0, %s4, %s2
  $region1: #{tpu_custom_call.1} parent=0
    #allocation2 [shape = 'u8[512]{0}', space=vmem, size = 0x400, scoped, tag = 'input window, operand 0, single buffered']
    #allocation3 [shape = 's32[1]{0}', space=sflag, size = 0x4, scoped, tag = 'scoped memory for tpu_custom_call.1']
    #allocation4 [shape = 's32[1]{0}', space=sflag, size = 0x4, scoped, tag = 'scoped memory for tpu_custom_call.1']
    #allocation5 [shape = 'u8[512]{0}', space=vmem, size = 0x400, scoped, tag = 'output window, operand 0, single buffered']
    %6 = vsyncpa [#allocation3], 0
    %7 = vsyncpa [#allocation4], 0
    // Predicated region
    $region2: #{tpu_custom_call.1} parent=1 // pred_check
      _
    $region3: #{tpu_custom_call.1} parent=1 // pred_check_branch
      %9 = sbr.rel (0) target = $region5
    $region4: #{tpu_custom_call.1} parent=1 // pred_region
      %11 = vsyncadd [#allocation3], 0
      %s13 = sshll.u32 %s0, 4
      %s14 = int_to_ptr.hbm [resolvable:$true] %s13
      %s15 = sshll.u32 [#allocation2], 4
      %s16 = int_to_ptr.vmem [resolvable:$true] %s15
      %18 = dma.hbm_to_vmem [thread:$0]  %s14, 16, %s16, [#allocation3]
    $region5: #{tpu_custom_call.1} parent=1 // pred_fallthru
      _
    // Predicated region
    $region6: #{tpu_custom_call.1} parent=1 // pred_check
      _
    $region7: #{tpu_custom_call.1} parent=1 // pred_check_branch
      %20 = sbr.rel (0) target = $region9
    $region8: #{tpu_custom_call.1} parent=1 // pred_region
      %22 = dma.done [#allocation3], 16
    $region9: #{tpu_custom_call.1} parent=1 // pred_fallthru
      _
    %v23 = vld [vmem:[#allocation2] sm:$0x1]
    %24 = vrot.lane.b32.xlu0 %v23, 1
    %v25 = vpop.permute.xlu0 %24
    %26 = vst [vmem:[#allocation5] sm:$0x1] %v25
    // Predicated region
    $region10: #{tpu_custom_call.1} parent=1 // pred_check
      _
    $region11: #{tpu_custom_call.1} parent=1 // pred_check_branch
      %28 = sbr.rel (0) target = $region13
    $region12: #{tpu_custom_call.1} parent=1 // pred_region
      %30 = vsyncadd [#allocation4], 0
      %s32 = sshll.u32 [#allocation5], 4
      %s33 = int_to_ptr.vmem [resolvable:$true] %s32
      %s34 = sshll.u32 %s1, 4
      %s35 = int_to_ptr.hbm [resolvable:$true] %s34
      %37 = dma.vmem_to_hbm [thread:$0]  %s33, 16, %s35, [#allocation4]
    $region13: #{tpu_custom_call.1} parent=1 // pred_fallthru
      _
    // Predicated region
    $region14: #{tpu_custom_call.1} parent=1 // pred_check
      _
    $region15: #{tpu_custom_call.1} parent=1 // pred_check_branch
      %39 = sbr.rel (0) target = $region17
    $region16: #{tpu_custom_call.1} parent=1 // pred_region
      %41 = dma.done [#allocation4], 16
    $region17: #{tpu_custom_call.1} parent=1 // pred_fallthru
      _
    %42 = vsyncpa [#allocation3], 1
    %43 = vsyncpa [#allocation4], 1

</llo_original>
